<compile_context>
chip_gen: v7x
topology: tpu7x:2x2x1
jax: 0.10.0
libtpu: 0.0.40
codegen_flags: <defaults>
</compile_context>

<pallas_src>
import functools

import jax
import jax.numpy as jnp
from jax.experimental import pallas as pl
from jax.experimental.pallas import tpu as pltpu


def _round_up(x, m):
    return ((x + m - 1) // m) * m


def _block_diag(w, n):
    """Block-diagonal replication of a [in, out] matrix, n times -> [n*in, n*out]."""
    din, dout = w.shape
    out = jnp.zeros((n * din, n * dout), w.dtype)
    for i in range(n):
        out = out.at[i * din:(i + 1) * din, i * dout:(i + 1) * dout].set(w)
    return out


def _proj_layer_kernel(x_ref, seg_ref, w1_ref, b1_ref, w2_ref, b2_ref,
                       gamma_ref, beta_ref, o_ref, *, eps, inv_d):
    # One folded row-tile of x: (TMf, Df) where each 128-lane row packs
    # FOLD independent original rows of D features.
    xf = x_ref[...].astype(jnp.float32)
    seg = seg_ref[...]                      # [Df, Df] block-of-ones segment matrix, f32

    # --- LayerNorm per D-lane segment (two-pass, MXU segment sums) ---
    mean = jnp.dot(xf, seg, preferred_element_type=jnp.float32) * inv_d
    xc = xf - mean
    var = jnp.dot(xc * xc, seg, preferred_element_type=jnp.float32) * inv_d
    xn = xc * jax.lax.rsqrt(var + eps)
    xn = xn * gamma_ref[...] + beta_ref[...]          # promotes to f32

    # --- dense1 (block-diagonal) + QuickGELU ---
    w1 = w1_ref[...]
    h = jnp.dot(xn.astype(w1.dtype), w1,
                preferred_element_type=jnp.float32) + b1_ref[...]
    # QuickGELU: h * sigmoid(1.702*h) == h * 0.5 * (1 + tanh(0.851*h))
    # (tanh = one EUP push vs. exp + reciprocal for sigmoid)
    h = h * (0.5 * (jnp.tanh(0.851 * h) + 1.0))

    # --- dense2 (block-diagonal) ---
    w2 = w2_ref[...]
    y = jnp.dot(h.astype(w2.dtype), w2,
                preferred_element_type=jnp.float32) + b2_ref[...]

    # TODO(synk): dropout (p=0.1) is identity here (inference / eval mode);
    # training would need pltpu.prng_seed + pltpu.prng_random_bits masking.
    # --- residual add with the ORIGINAL (pre-LN) input ---
    o_ref[...] = (y + xf).astype(o_ref.dtype)


def proj_layer(x, params, *, eps=1e-12, tile_m=8192, min_steps=4):
    """x: [B, S, D]; params: w1[D,H], b1[H], w2[H,D], b2[D], gamma[D], beta[D].

    Weights must be [in, out] (transpose of torch nn.Linear.weight) and the
    module requires in_dim == out_dim (LayerNorm(out_dim) applied to input).
    """
    B, S, D = x.shape
    w1, b1, w2, b2 = params["w1"], params["b1"], params["w2"], params["b2"]
    gamma, beta = params["gamma"], params["beta"]
    H = w1.shape[1]

    # Enforce the module contract instead of silently mis-computing.
    assert w1.shape[0] == D, "w1 must be [in_dim, hidden] (torch weight transposed)"
    assert w2.shape == (H, D), "w2 must be [hidden, out_dim] and in_dim == out_dim"
    assert gamma.shape == (D,) and beta.shape == (D,)

    M = B * S

    # --- lane folding: pack FOLD rows of D features into one 128-lane row ---
    fold = (128 // D) if (D <= 128 and 128 % D == 0) else 1
    Df, Hf = fold * D, fold * H

    # --- row-tile sizing (folded rows) ---
    # VMEM-aware cap (v7x has only 64 MiB physical / 32 MiB scoped): rough
    # per-folded-row cost = double-buffered in/out tiles + f32 intermediates.
    bytes_per_row = 36 * Df + 4 * Hf
    vmem_budget = 20 * 1024 * 1024
    tile_f = max(8, (tile_m // fold) // 8 * 8)
    tile_f = min(tile_f, max(8, (vmem_budget // bytes_per_row) // 8 * 8))

    M_f = pl.cdiv(M, fold)
    # Keep a few grid steps for pipelining / megacore sharding, but don't pad
    # tiny inputs up to a huge tile.
    tile_f_eff = min(tile_f, max(8, _round_up(pl.cdiv(M_f, min_steps), 8)))
    M_f_pad = _round_up(M_f, tile_f_eff)
    M_pad = M_f_pad * fold

    x2 = x.reshape(M, D)
    if M_pad != M:
        # Zero-padded rows are well-defined under LN and sliced off below.
        x2 = jnp.pad(x2, ((0, M_pad - M), (0, 0)))
    xf2 = x2.reshape(M_f_pad, Df)           # free, contiguous reshape

    # --- parameter prep: block-diagonal weights, lane-tiled vectors ---
    seg = _block_diag(jnp.ones((D, D), jnp.float32), fold)       # [Df, Df]
    w1_bd = _block_diag(w1, fold)                                # [Df, Hf]
    w2_bd = _block_diag(w2, fold)                                # [Hf, Df]
    b1_t = jnp.tile(b1, fold).reshape(1, Hf)
    b2_t = jnp.tile(b2, fold).reshape(1, Df)
    gamma_t = jnp.tile(gamma, fold).reshape(1, Df)
    beta_t = jnp.tile(beta, fold).reshape(1, Df)

    grid = (M_f_pad // tile_f_eff,)

    kernel = functools.partial(_proj_layer_kernel, eps=eps, inv_d=1.0 / D)

    out = pl.pallas_call(
        kernel,
        out_shape=jax.ShapeDtypeStruct((M_f_pad, Df), x.dtype),
        grid_spec=pltpu.PrefetchScalarGridSpec(
            num_scalar_prefetch=0,
            grid=grid,
            in_specs=[
                pl.BlockSpec((tile_f_eff, Df), lambda i: (i, 0)),  # x rows
                pl.BlockSpec((Df, Df), lambda i: (0, 0)),          # segment-ones (resident)
                pl.BlockSpec((Df, Hf), lambda i: (0, 0)),          # w1 block-diag (resident)
                pl.BlockSpec((1, Hf), lambda i: (0, 0)),           # b1
                pl.BlockSpec((Hf, Df), lambda i: (0, 0)),          # w2 block-diag (resident)
                pl.BlockSpec((1, Df), lambda i: (0, 0)),           # b2
                pl.BlockSpec((1, Df), lambda i: (0, 0)),           # gamma
                pl.BlockSpec((1, Df), lambda i: (0, 0)),           # beta
            ],
            out_specs=pl.BlockSpec((tile_f_eff, Df), lambda i: (i, 0)),
        ),
        compiler_params=pltpu.CompilerParams(
            dimension_semantics=("parallel",),
            vmem_limit_bytes=32 * 1024 * 1024,
        ),
    )(xf2, seg, w1_bd, b1_t, w2_bd, b2_t, gamma_t, beta_t)

    out = out.reshape(M_pad, D)
    if M_pad != M:
        out = out[:M]
    return out.reshape(B, S, D)


def _reference(x, params, eps=1e-12):
    """Pure-JAX reference for correctness checking."""
    xf = x.astype(jnp.float32)
    mean = jnp.mean(xf, axis=-1, keepdims=True)
    var = jnp.mean((xf - mean) ** 2, axis=-1, keepdims=True)
    xn = (xf - mean) / jnp.sqrt(var + eps)
    xn = xn * params["gamma"] + params["beta"]
    h = xn @ params["w1"] + params["b1"]
    h = h * jax.nn.sigmoid(1.702 * h)
    y = h @ params["w2"] + params["b2"]
    return (y + xf).astype(x.dtype)


if __name__ == "__main__":
    # Small shapes consistent with the module: in_dim == out_dim == 32, hidden 64.
    D, H = 32, 64

    key = jax.random.PRNGKey(0)
    kx, k1, k2, k3, k4, kx2 = jax.random.split(key, 6)

    params = {
        # stored as [in, out] (transpose of torch nn.Linear.weight)
        "w1": jax.random.normal(k1, (D, H), dtype=jnp.float32) * 0.05,
        "b1": jax.random.normal(k2, (H,), dtype=jnp.float32) * 0.01,
        "w2": jax.random.normal(k3, (H, D), dtype=jnp.float32) * 0.05,
        "b2": jax.random.normal(k4, (D,), dtype=jnp.float32) * 0.01,
        "gamma": jnp.ones((D,), dtype=jnp.float32),
        "beta": jnp.zeros((D,), dtype=jnp.float32),
    }

    # Case 1: B*S = 18, not divisible by the fold*tile -> exercises padded tail.
    B, S = 2, 9
    x = jax.random.normal(kx, (B, S, D), dtype=jnp.float32)
    out = jax.block_until_ready(proj_layer(x, params))
    ref = _reference(x, params)
    assert out.shape == (B, S, D)
    assert jnp.allclose(out, ref, atol=2e-4, rtol=2e-4), "mismatch vs reference (case 1)"

    # Case 2: slightly larger, multi-step grid path.
    B2, S2 = 3, 77
    x2 = jax.random.normal(kx2, (B2, S2, D), dtype=jnp.float32)
    out2 = jax.block_until_ready(proj_layer(x2, params))
    ref2 = _reference(x2, params)
    assert out2.shape == (B2, S2, D)
    assert jnp.allclose(out2, ref2, atol=2e-4, rtol=2e-4), "mismatch vs reference (case 2)"

    print("KERNEL_OK")
</pallas_src>

<mosaic_0001>
module attributes {stable_mosaic.version = 11 : i64} {
  func.func @_proj_layer_kernel(%arg0: i32, %arg1: memref<8x128xf32, #tpu.memory_space<vmem>>, %arg2: memref<128x128xf32, #tpu.memory_space<vmem>>, %arg3: memref<128x256xf32, #tpu.memory_space<vmem>>, %arg4: memref<1x256xf32, #tpu.memory_space<vmem>>, %arg5: memref<256x128xf32, #tpu.memory_space<vmem>>, %arg6: memref<1x128xf32, #tpu.memory_space<vmem>>, %arg7: memref<1x128xf32, #tpu.memory_space<vmem>>, %arg8: memref<1x128xf32, #tpu.memory_space<vmem>>, %arg9: memref<8x128xf32, #tpu.memory_space<vmem>>) attributes {dimension_semantics = [#tpu.dimension_semantics<parallel>], iteration_bounds = array<i64: 1>, scalar_prefetch = 0 : i64, scratch_operands = 0 : i64, tpu.core_type = #tpu.core_type<tc>, window_params = [{transform_indices = @transform_0, window_bounds = array<i64: 8, 128>}, {pipeline_mode = #tpu.pipeline_mode<synchronous>, transform_indices = @transform_1, window_bounds = array<i64: 128, 128>}, {pipeline_mode = #tpu.pipeline_mode<synchronous>, transform_indices = @transform_2, window_bounds = array<i64: 128, 256>}, {pipeline_mode = #tpu.pipeline_mode<synchronous>, transform_indices = @transform_3, window_bounds = array<i64: 1, 256>}, {pipeline_mode = #tpu.pipeline_mode<synchronous>, transform_indices = @transform_4, window_bounds = array<i64: 256, 128>}, {pipeline_mode = #tpu.pipeline_mode<synchronous>, transform_indices = @transform_5, window_bounds = array<i64: 1, 128>}, {pipeline_mode = #tpu.pipeline_mode<synchronous>, transform_indices = @transform_6, window_bounds = array<i64: 1, 128>}, {pipeline_mode = #tpu.pipeline_mode<synchronous>, transform_indices = @transform_7, window_bounds = array<i64: 1, 128>}, {transform_indices = @transform_8, window_bounds = array<i64: 8, 128>}]} {
    %c0 = arith.constant 0 : index
    %c0_0 = arith.constant 0 : index
    %0 = vector.load %arg1[%c0, %c0_0] : memref<8x128xf32, #tpu.memory_space<vmem>>, vector<8x128xf32>
    %c0_1 = arith.constant 0 : index
    %c0_2 = arith.constant 0 : index
    %1 = vector.load %arg2[%c0_1, %c0_2] : memref<128x128xf32, #tpu.memory_space<vmem>>, vector<128x128xf32>
    %cst = arith.constant dense<0.000000e+00> : vector<8x128xf32>
    %2 = tpu.matmul %0, %1, %cst {dimension_numbers = #tpu.dot_dimension_numbers<[1], [0], [0], [1], [0, 0, 1, 1], [], []>} : vector<8x128xf32>, vector<128x128xf32>, vector<8x128xf32> -> vector<8x128xf32>
    %cst_3 = arith.constant 3.125000e-02 : f32
    %3 = vector.broadcast %cst_3 : f32 to vector<8x128xf32>
    %4 = arith.mulf %2, %3 : vector<8x128xf32>
    %5 = arith.subf %0, %4 : vector<8x128xf32>
    %6 = arith.mulf %5, %5 : vector<8x128xf32>
    %cst_4 = arith.constant dense<0.000000e+00> : vector<8x128xf32>
    %7 = tpu.matmul %6, %1, %cst_4 {dimension_numbers = #tpu.dot_dimension_numbers<[1], [0], [0], [1], [0, 0, 1, 1], [], []>} : vector<8x128xf32>, vector<128x128xf32>, vector<8x128xf32> -> vector<8x128xf32>
    %cst_5 = arith.constant 3.125000e-02 : f32
    %8 = vector.broadcast %cst_5 : f32 to vector<8x128xf32>
    %9 = arith.mulf %7, %8 : vector<8x128xf32>
    %cst_6 = arith.constant 9.99999996E-13 : f32
    %10 = vector.broadcast %cst_6 : f32 to vector<8x128xf32>
    %11 = arith.addf %9, %10 : vector<8x128xf32>
    %12 = math.rsqrt %11 : vector<8x128xf32>
    %13 = arith.mulf %5, %12 : vector<8x128xf32>
    %c0_7 = arith.constant 0 : index
    %c0_8 = arith.constant 0 : index
    %14 = vector.load %arg7[%c0_7, %c0_8] : memref<1x128xf32, #tpu.memory_space<vmem>>, vector<1x128xf32>
    %15 = vector.broadcast %14 : vector<1x128xf32> to vector<8x128xf32>
    %16 = arith.mulf %13, %15 : vector<8x128xf32>
    %c0_9 = arith.constant 0 : index
    %c0_10 = arith.constant 0 : index
    %17 = vector.load %arg8[%c0_9, %c0_10] : memref<1x128xf32, #tpu.memory_space<vmem>>, vector<1x128xf32>
    %18 = vector.broadcast %17 : vector<1x128xf32> to vector<8x128xf32>
    %19 = arith.addf %16, %18 : vector<8x128xf32>
    %c0_11 = arith.constant 0 : index
    %c0_12 = arith.constant 0 : index
    %20 = vector.load %arg3[%c0_11, %c0_12] : memref<128x256xf32, #tpu.memory_space<vmem>>, vector<128x256xf32>
    %cst_13 = arith.constant dense<0.000000e+00> : vector<8x256xf32>
    %21 = tpu.matmul %19, %20, %cst_13 {dimension_numbers = #tpu.dot_dimension_numbers<[1], [0], [0], [1], [0, 0, 1, 1], [], []>} : vector<8x128xf32>, vector<128x256xf32>, vector<8x256xf32> -> vector<8x256xf32>
    %c0_14 = arith.constant 0 : index
    %c0_15 = arith.constant 0 : index
    %22 = vector.load %arg4[%c0_14, %c0_15] : memref<1x256xf32, #tpu.memory_space<vmem>>, vector<1x256xf32>
    %23 = vector.broadcast %22 : vector<1x256xf32> to vector<8x256xf32>
    %24 = arith.addf %21, %23 : vector<8x256xf32>
    %cst_16 = arith.constant 8.510000e-01 : f32
    %25 = vector.broadcast %cst_16 : f32 to vector<8x256xf32>
    %26 = arith.mulf %25, %24 : vector<8x256xf32>
    %27 = math.tanh %26 : vector<8x256xf32>
    %cst_17 = arith.constant 1.000000e+00 : f32
    %28 = vector.broadcast %cst_17 : f32 to vector<8x256xf32>
    %29 = arith.addf %27, %28 : vector<8x256xf32>
    %cst_18 = arith.constant 5.000000e-01 : f32
    %30 = vector.broadcast %cst_18 : f32 to vector<8x256xf32>
    %31 = arith.mulf %30, %29 : vector<8x256xf32>
    %32 = arith.mulf %24, %31 : vector<8x256xf32>
    %c0_19 = arith.constant 0 : index
    %c0_20 = arith.constant 0 : index
    %33 = vector.load %arg5[%c0_19, %c0_20] : memref<256x128xf32, #tpu.memory_space<vmem>>, vector<256x128xf32>
    %cst_21 = arith.constant dense<0.000000e+00> : vector<8x128xf32>
    %34 = tpu.matmul %32, %33, %cst_21 {dimension_numbers = #tpu.dot_dimension_numbers<[1], [0], [0], [1], [0, 0, 1, 1], [], []>} : vector<8x256xf32>, vector<256x128xf32>, vector<8x128xf32> -> vector<8x128xf32>
    %c0_22 = arith.constant 0 : index
    %c0_23 = arith.constant 0 : index
    %35 = vector.load %arg6[%c0_22, %c0_23] : memref<1x128xf32, #tpu.memory_space<vmem>>, vector<1x128xf32>
    %36 = vector.broadcast %35 : vector<1x128xf32> to vector<8x128xf32>
    %37 = arith.addf %34, %36 : vector<8x128xf32>
    %38 = arith.addf %37, %0 : vector<8x128xf32>
    %c0_24 = arith.constant 0 : index
    %c0_25 = arith.constant 0 : index
    %39 = vector.load %arg9[%c0_24, %c0_25] : memref<8x128xf32, #tpu.memory_space<vmem>>, vector<8x128xf32>
    tpu.vector_store %arg9[%c0_24, %c0_25], %38 {strides = array<i32>} : memref<8x128xf32, #tpu.memory_space<vmem>>, vector<8x128xf32>,
    return
  }
  func.func @transform_0(%arg0: i32) -> (i32, i32) {
    %c0_i32 = arith.constant 0 : i32
    %c0_i32_0 = arith.constant 0 : i32
    return %arg0, %c0_i32 : i32, i32
  }
  func.func @transform_1(%arg0: i32) -> (i32, i32) {
    %c0_i32 = arith.constant 0 : i32
    %c0_i32_0 = arith.constant 0 : i32
    %c0_i32_1 = arith.constant 0 : i32
    return %c0_i32, %c0_i32_0 : i32, i32
  }
  func.func @transform_2(%arg0: i32) -> (i32, i32) {
    %c0_i32 = arith.constant 0 : i32
    %c0_i32_0 = arith.constant 0 : i32
    %c0_i32_1 = arith.constant 0 : i32
    return %c0_i32, %c0_i32_0 : i32, i32
  }
  func.func @transform_3(%arg0: i32) -> (i32, i32) {
    %c0_i32 = arith.constant 0 : i32
    %c0_i32_0 = arith.constant 0 : i32
    %c0_i32_1 = arith.constant 0 : i32
    return %c0_i32, %c0_i32_0 : i32, i32
  }
  func.func @transform_4(%arg0: i32) -> (i32, i32) {
    %c0_i32 = arith.constant 0 : i32
    %c0_i32_0 = arith.constant 0 : i32
    %c0_i32_1 = arith.constant 0 : i32
    return %c0_i32, %c0_i32_0 : i32, i32
  }
  func.func @transform_5(%arg0: i32) -> (i32, i32) {
    %c0_i32 = arith.constant 0 : i32
    %c0_i32_0 = arith.constant 0 : i32
    %c0_i32_1 = arith.constant 0 : i32
    return %c0_i32, %c0_i32_0 : i32, i32
  }
  func.func @transform_6(%arg0: i32) -> (i32, i32) {
    %c0_i32 = arith.constant 0 : i32
    %c0_i32_0 = arith.constant 0 : i32
    %c0_i32_1 = arith.constant 0 : i32
    return %c0_i32, %c0_i32_0 : i32, i32
  }
  func.func @transform_7(%arg0: i32) -> (i32, i32) {
    %c0_i32 = arith.constant 0 : i32
    %c0_i32_0 = arith.constant 0 : i32
    %c0_i32_1 = arith.constant 0 : i32
    return %c0_i32, %c0_i32_0 : i32, i32
  }
  func.func @transform_8(%arg0: i32) -> (i32, i32) {
    %c0_i32 = arith.constant 0 : i32
    %c0_i32_0 = arith.constant 0 : i32
    return %arg0, %c0_i32 : i32, i32
  }
}

</mosaic_0001>

<llo_original>
// kernel: tpu_custom_call.1
$region0: #{tpu_custom_call.1}
  #allocation0 [shape = 'u32[]', space=smem, size = 0x4, offset = 0x4, fixed_abs, tag = 'smem constant byte address 0x4 - core index']
  #allocation1 [shape = 'u32[144,128]{1,0:T(1,128)}', space=vmem, size = 0x12000, scoped, tag = 'internal scratch']
  %s0 = inlined_call_operand.hbm [shape: f32[8,128], index: 0, kind: input, shape index: {}]
  %s1 = inlined_call_operand.hbm [shape: f32[128,128], index: 1, kind: input, shape index: {}]
  %s2 = inlined_call_operand.hbm [shape: f32[128,256], index: 2, kind: input, shape index: {}]
  %s3 = inlined_call_operand.vmem [shape: f32[1,256], index: 3, kind: input, shape index: {}]
  %s4 = inlined_call_operand.hbm [shape: f32[256,128], index: 4, kind: input, shape index: {}]
  %s5 = inlined_call_operand.vmem [shape: f32[1,128], index: 5, kind: input, shape index: {}]
  %s6 = inlined_call_operand.vmem [shape: f32[1,128], index: 6, kind: input, shape index: {}]
  %s7 = inlined_call_operand.vmem [shape: f32[1,128], index: 7, kind: input, shape index: {}]
  %s8 = inlined_call_operand.hbm [shape: f32[8,128], index: 8, kind: output, shape index: {}]
  %s9 = sld [smem:[#allocation0]]
  $region58: #{tpu_custom_call.1} parent=0
    _
  %s11 = ssub.s32 1, %s9
  %s12 = scalar_select 0, %s11, %s9
  $region1: #{tpu_custom_call.1} parent=0
    #allocation2 [shape = 'u8[4096]{0}', space=vmem, size = 0x1000, scoped, tag = 'input window, operand 0, single buffered']
    #allocation3 [shape = 's32[1]{0}', space=sflag, size = 0x4, scoped, tag = 'scoped memory for tpu_custom_call.1']
    #allocation4 [shape = 's32[1]{0}', space=sflag, size = 0x4, scoped, tag = 'scoped memory for tpu_custom_call.1']
    #allocation5 [shape = 'u8[65536]{0}', space=vmem, size = 0x10000, scoped, tag = 'input window, operand 1, single buffered']
    #allocation6 [shape = 's32[1]{0}', space=sflag, size = 0x4, scoped, tag = 'scoped memory for tpu_custom_call.1']
    #allocation7 [shape = 'u8[131072]{0}', space=vmem, size = 0x20000, scoped, tag = 'input window, operand 2, single buffered']
    #allocation8 [shape = 'u8[131072]{0}', space=vmem, size = 0x20000, scoped, tag = 'input window, operand 4, single buffered']
    #allocation9 [shape = 's32[1]{0}', space=sflag, size = 0x4, scoped, tag = 'scoped memory for tpu_custom_call.1']
    #allocation10 [shape = 'u8[4096]{0}', space=vmem, size = 0x1000, scoped, tag = 'output window, operand 0, single buffered']
    %13 = vsyncpa [#allocation3], 0
    %14 = vsyncpa [#allocation6], 0
    %15 = vsyncpa [#allocation9], 0
    %16 = vsyncpa [#allocation4], 0
    // Predicated region
    $region2: #{tpu_custom_call.1} parent=1 // pred_check
      _
    $region3: #{tpu_custom_call.1} parent=1 // pred_check_branch
      %18 = sbr.rel (0) target = $region5
    $region4: #{tpu_custom_call.1} parent=1 // pred_region
      %s20 = ssub.s32 128, 128
      %21 = vsyncadd [#allocation3], %s20
      %s23 = sshll.u32 [#allocation2], 4
      %s24 = int_to_ptr.vmem [resolvable:$true] %s23
      %26 = dma.hbm_to_vmem [thread:$0]  %s0, 128, %s24, [#allocation3]
    $region5: #{tpu_custom_call.1} parent=1 // pred_fallthru
      _
    // Predicated region
    $region6: #{tpu_custom_call.1} parent=1 // pred_check
      _
    $region7: #{tpu_custom_call.1} parent=1 // pred_check_branch
      %28 = sbr.rel (0) target = $region9
    $region8: #{tpu_custom_call.1} parent=1 // pred_region
      %s30 = ssub.s32 2048, 2048
      %31 = vsyncadd [#allocation6], %s30
      %s32 = sshll.u32 [#allocation5], 4
      %s33 = int_to_ptr.vmem [resolvable:$true] %s32
      %38 = dma.hbm_to_vmem [thread:$0]  %s1, 2048, %s33, [#allocation6], 128, 128, 8
    $region9: #{tpu_custom_call.1} parent=1 // pred_fallthru
      _
    // Predicated region
    $region10: #{tpu_custom_call.1} parent=1 // pred_check
      _
    $region11: #{tpu_custom_call.1} parent=1 // pred_check_branch
      %40 = sbr.rel (0) target = $region13
    $region12: #{tpu_custom_call.1} parent=1 // pred_region
      %s42 = ssub.s32 4096, 4096
      %43 = vsyncadd [#allocation6], %s42
      %s44 = sshll.u32 [#allocation7], 4
      %s45 = int_to_ptr.vmem [resolvable:$true] %s44
      %50 = dma.hbm_to_vmem [thread:$0]  %s2, 4096, %s45, [#allocation6], 256, 256, 16
    $region13: #{tpu_custom_call.1} parent=1 // pred_fallthru
      _
    // Predicated region
    $region14: #{tpu_custom_call.1} parent=1 // pred_check
      _
    $region15: #{tpu_custom_call.1} parent=1 // pred_check_branch
      %52 = sbr.rel (0) target = $region17
    $region16: #{tpu_custom_call.1} parent=1 // pred_region
      _
    $region17: #{tpu_custom_call.1} parent=1 // pred_fallthru
      _
    // Predicated region
    $region18: #{tpu_custom_call.1} parent=1 // pred_check
      _
    $region19: #{tpu_custom_call.1} parent=1 // pred_check_branch
      %54 = sbr.rel (0) target = $region21
    $region20: #{tpu_custom_call.1} parent=1 // pred_region
      %s56 = ssub.s32 4096, 4096
      %57 = vsyncadd [#allocation9], %s56
      %s58 = sshll.u32 [#allocation8], 4
      %s59 = int_to_ptr.vmem [resolvable:$true] %s58
      %64 = dma.hbm_to_vmem [thread:$0]  %s4, 4096, %s59, [#allocation9], 128, 128, 8
    $region21: #{tpu_custom_call.1} parent=1 // pred_fallthru
      _
    // Predicated region
    $region22: #{tpu_custom_call.1} parent=1 // pred_check
      _
    $region23: #{tpu_custom_call.1} parent=1 // pred_check_branch
      %66 = sbr.rel (0) target = $region25
    $region24: #{tpu_custom_call.1} parent=1 // pred_region
      _
    $region25: #{tpu_custom_call.1} parent=1 // pred_fallthru
      _
    // Predicated region
    $region26: #{tpu_custom_call.1} parent=1 // pred_check
      _
    $region27: #{tpu_custom_call.1} parent=1 // pred_check_branch
      %68 = sbr.rel (0) target = $region29
    $region28: #{tpu_custom_call.1} parent=1 // pred_region
      _
    $region29: #{tpu_custom_call.1} parent=1 // pred_fallthru
      _
    // Predicated region
    $region30: #{tpu_custom_call.1} parent=1 // pred_check
      _
    $region31: #{tpu_custom_call.1} parent=1 // pred_check_branch
      %70 = sbr.rel (0) target = $region33
    $region32: #{tpu_custom_call.1} parent=1 // pred_region
      _
    $region33: #{tpu_custom_call.1} parent=1 // pred_fallthru
      _
    // Predicated region
    $region34: #{tpu_custom_call.1} parent=1 // pred_check
      _
    $region35: #{tpu_custom_call.1} parent=1 // pred_check_branch
      %72 = sbr.rel (0) target = $region37
    $region36: #{tpu_custom_call.1} parent=1 // pred_region
      %73 = dma.done [#allocation3], 128
    $region37: #{tpu_custom_call.1} parent=1 // pred_fallthru
      _
    // Predicated region
    $region38: #{tpu_custom_call.1} parent=1 // pred_check
      _
    $region39: #{tpu_custom_call.1} parent=1 // pred_check_branch
      %75 = sbr.rel (0) target = $region41
    $region40: #{tpu_custom_call.1} parent=1 // pred_region
      %76 = dma.done [#allocation6], 2048
    $region41: #{tpu_custom_call.1} parent=1 // pred_fallthru
      _
    // Predicated region
    $region42: #{tpu_custom_call.1} parent=1 // pred_check
      _
    $region43: #{tpu_custom_call.1} parent=1 // pred_check_branch
      %78 = sbr.rel (0) target = $region45
    $region44: #{tpu_custom_call.1} parent=1 // pred_region
      %79 = dma.done [#allocation6], 4096
    $region45: #{tpu_custom_call.1} parent=1 // pred_fallthru
      _
    // Predicated region
    $region46: #{tpu_custom_call.1} parent=1 // pred_check
      _
    $region47: #{tpu_custom_call.1} parent=1 // pred_check_branch
      %81 = sbr.rel (0) target = $region49
    $region48: #{tpu_custom_call.1} parent=1 // pred_region
      %82 = dma.done [#allocation9], 4096
    $region49: #{tpu_custom_call.1} parent=1 // pred_fallthru
      _
    %v83 = vld [vmem:[#allocation2] sm:$0xff]
    %v84 = vld [vmem:[#allocation5] sm:$0xff]
    %v85 = vld [vmem:[#allocation5 + $0x8] sm:$0xff]
    %v86 = vld [vmem:[#allocation5 + $0x10] sm:$0xff]
    %v87 = vld [vmem:[#allocation5 + $0x18] sm:$0xff]
    %v88 = vld [vmem:[#allocation5 + $0x20] sm:$0xff]
    %v89 = vld [vmem:[#allocation5 + $0x28] sm:$0xff]
    %v90 = vld [vmem:[#allocation5 + $0x30] sm:$0xff]
    %v91 = vld [vmem:[#allocation5 + $0x38] sm:$0xff]
    %v92 = vld [vmem:[#allocation5 + $0x40] sm:$0xff]
    %v93 = vld [vmem:[#allocation5 + $0x48] sm:$0xff]
    %v94 = vld [vmem:[#allocation5 + $0x50] sm:$0xff]
    %v95 = vld [vmem:[#allocation5 + $0x58] sm:$0xff]
    %v96 = vld [vmem:[#allocation5 + $0x60] sm:$0xff]
    %v97 = vld [vmem:[#allocation5 + $0x68] sm:$0xff]
    %v98 = vld [vmem:[#allocation5 + $0x70] sm:$0xff]
    %v99 = vld [vmem:[#allocation5 + $0x78] sm:$0xff]
    %100 = vmatprep.subr.mxu0 0.0
    %101 = vmatpush1.msra.mxu0 %v84
    %102 = vmatprep.subr.mxu0 0.0
    %103 = vmatpush1.msra.mxu0 %v85
    %104 = vmatprep.subr.mxu0 0.0
    %105 = vmatpush1.msra.mxu0 %v86
    %106 = vmatprep.subr.mxu0 0.0
    %107 = vmatpush1.msra.mxu0 %v87
    %108 = vmatprep.subr.mxu0 0.0
    %109 = vmatpush1.msra.mxu0 %v88
    %110 = vmatprep.subr.mxu0 0.0
    %111 = vmatpush1.msra.mxu0 %v89
    %112 = vmatprep.subr.mxu0 0.0
    %113 = vmatpush1.msra.mxu0 %v90
    %114 = vmatprep.subr.mxu0 0.0
    %115 = vmatpush1.msra.mxu0 %v91
    %116 = vmatprep.subr.mxu0 0.0
    %117 = vmatpush1.msra.mxu0 %v92
    %118 = vmatprep.subr.mxu0 0.0
    %119 = vmatpush1.msra.mxu0 %v93
    %120 = vmatprep.subr.mxu0 0.0
    %121 = vmatpush1.msra.mxu0 %v94
    %122 = vmatprep.subr.mxu0 0.0
    %123 = vmatpush1.msra.mxu0 %v95
    %124 = vmatprep.subr.mxu0 0.0
    %125 = vmatpush1.msra.mxu0 %v96
    %126 = vmatprep.subr.mxu0 0.0
    %127 = vmatpush1.msra.mxu0 %v97
    %128 = vmatprep.subr.mxu0 0.0
    %129 = vmatpush1.msra.mxu0 %v98
    %130 = vmatprep.subr.mxu0 0.0
    %131 = vmatpush1.msra.mxu0 %v99
    %132 = vmatprep.subr.mxu0 0.0
    %133 = vmatpush1.msra.mxu0 0.0
    %134 = vmatprep.subr.mxu0 0.0
    %135 = vmatpush1.msra.mxu0 0.0
    %136 = vmatprep.subr.mxu0 0.0
    %137 = vmatpush1.msra.mxu0 0.0
    %138 = vmatprep.subr.mxu0 0.0
    %139 = vmatpush1.msra.mxu0 0.0
    %140 = vmatprep.subr.mxu0 0.0
    %141 = vmatpush1.msra.mxu0 0.0
    %142 = vmatprep.subr.mxu0 0.0
    %143 = vmatpush1.msra.mxu0 0.0
    %144 = vmatprep.subr.mxu0 0.0
    %145 = vmatpush1.msra.mxu0 0.0
    %146 = vmatprep.subr.mxu0 0.0
    %147 = vmatpush1.msra.mxu0 0.0
    %148 = vmatprep.subr.mxu0 0.0
    %149 = vmatpush1.msra.mxu0 0.0
    %150 = vmatprep.subr.mxu0 0.0
    %151 = vmatpush1.msra.mxu0 0.0
    %152 = vmatprep.subr.mxu0 0.0
    %153 = vmatpush1.msra.mxu0 0.0
    %154 = vmatprep.subr.mxu0 0.0
    %155 = vmatpush1.msra.mxu0 0.0
    %156 = vmatprep.subr.mxu0 0.0
    %157 = vmatpush1.msra.mxu0 0.0
    %158 = vmatprep.subr.mxu0 0.0
    %159 = vmatpush1.msra.mxu0 0.0
    %160 = vmatprep.subr.mxu0 0.0
    %161 = vmatpush1.msra.mxu0 0.0
    %162 = vmatprep.subr.mxu0 0.0
    %163 = vmatpush1.msra.mxu0 0.0
    %164 = vmatprep.mubr.f32.mxu0 0.0
    %165 = vmatmul.mubr.f32.gmra.mrb[0].mxu0 %v83
    %v166 = vpop.f32.mrb[0].mxu0
    %v167 = vadd.f32 0.0, %v166
    %v168 = vpop.f32.mrb[0].mxu0
    %169 = vdwg.mxu0
    %v170 = vmul.f32 %v167, 0.03125
    %v171 = vsub.f32 %v83, %v170
    %v172 = vmul.f32 %v171, %v171
    %173 = vmatprep.subr.mxu0 0.0
    %174 = vmatpush1.msra.mxu0 %v84
    %175 = vmatprep.subr.mxu0 0.0
    %176 = vmatpush1.msra.mxu0 %v85
    %177 = vmatprep.subr.mxu0 0.0
    %178 = vmatpush1.msra.mxu0 %v86
    %179 = vmatprep.subr.mxu0 0.0
    %180 = vmatpush1.msra.mxu0 %v87
    %181 = vmatprep.subr.mxu0 0.0
    %182 = vmatpush1.msra.mxu0 %v88
    %183 = vmatprep.subr.mxu0 0.0
    %184 = vmatpush1.msra.mxu0 %v89
    %185 = vmatprep.subr.mxu0 0.0
    %186 = vmatpush1.msra.mxu0 %v90
    %187 = vmatprep.subr.mxu0 0.0
    %188 = vmatpush1.msra.mxu0 %v91
    %189 = vmatprep.subr.mxu0 0.0
    %190 = vmatpush1.msra.mxu0 %v92
    %191 = vmatprep.subr.mxu0 0.0
    %192 = vmatpush1.msra.mxu0 %v93
    %193 = vmatprep.subr.mxu0 0.0
    %194 = vmatpush1.msra.mxu0 %v94
    %195 = vmatprep.subr.mxu0 0.0
    %196 = vmatpush1.msra.mxu0 %v95
    %197 = vmatprep.subr.mxu0 0.0
    %198 = vmatpush1.msra.mxu0 %v96
    %199 = vmatprep.subr.mxu0 0.0
    %200 = vmatpush1.msra.mxu0 %v97
    %201 = vmatprep.subr.mxu0 0.0
    %202 = vmatpush1.msra.mxu0 %v98
    %203 = vmatprep.subr.mxu0 0.0
    %204 = vmatpush1.msra.mxu0 %v99
    %205 = vmatprep.subr.mxu0 0.0
    %206 = vmatpush1.msra.mxu0 0.0
    %207 = vmatprep.subr.mxu0 0.0
    %208 = vmatpush1.msra.mxu0 0.0
    %209 = vmatprep.subr.mxu0 0.0
    %210 = vmatpush1.msra.mxu0 0.0
    %211 = vmatprep.subr.mxu0 0.0
    %212 = vmatpush1.msra.mxu0 0.0
    %213 = vmatprep.subr.mxu0 0.0
    %214 = vmatpush1.msra.mxu0 0.0
    %215 = vmatprep.subr.mxu0 0.0
    %216 = vmatpush1.msra.mxu0 0.0
    %217 = vmatprep.subr.mxu0 0.0
    %218 = vmatpush1.msra.mxu0 0.0
    %219 = vmatprep.subr.mxu0 0.0
    %220 = vmatpush1.msra.mxu0 0.0
    %221 = vmatprep.subr.mxu0 0.0
    %222 = vmatpush1.msra.mxu0 0.0
    %223 = vmatprep.subr.mxu0 0.0
    %224 = vmatpush1.msra.mxu0 0.0
    %225 = vmatprep.subr.mxu0 0.0
    %226 = vmatpush1.msra.mxu0 0.0
    %227 = vmatprep.subr.mxu0 0.0
    %228 = vmatpush1.msra.mxu0 0.0
    %229 = vmatprep.subr.mxu0 0.0
    %230 = vmatpush1.msra.mxu0 0.0
    %231 = vmatprep.subr.mxu0 0.0
    %232 = vmatpush1.msra.mxu0 0.0
    %233 = vmatprep.subr.mxu0 0.0
    %234 = vmatpush1.msra.mxu0 0.0
    %235 = vmatprep.subr.mxu0 0.0
    %236 = vmatpush1.msra.mxu0 0.0
    %237 = vmatprep.mubr.f32.mxu0 0.0
    %238 = vmatmul.mubr.f32.gmra.mrb[0].mxu0 %v172
    %v239 = vpop.f32.mrb[0].mxu0
    %v240 = vadd.f32 0.0, %v239
    %v241 = vpop.f32.mrb[0].mxu0
    %242 = vdwg.mxu0
    %v243 = vmul.f32 %v240, 0.03125
    %v244 = vadd.f32 %v243, 1e-12
    %v245 = vrsqrt.pop %v244
    %v246 = vmul.f32 %v171, %v245
    %v247 = vld [vmem:[%s6] sm:$0x1]
    %v249 = vlaneseq
    %v250 = vshrl.u32 %v249, 7
    %v251 = vsub.s32 0, %v250
    %v252 = vrot.slane %v247, %v251
    %v254 = vmul.f32 %v246, %v252
    %v255 = vld [vmem:[%s7] sm:$0x1]
    %v257 = vlaneseq
    %v258 = vshrl.u32 %v257, 7
    %v259 = vsub.s32 0, %v258
    %v260 = vrot.slane %v255, %v259
    %v262 = vadd.f32 %v254, %v260
    %v263 = vld [vmem:[#allocation7] sm:$0xff]
    %v264 = vld [vmem:[#allocation7 + $0x8] sm:$0xff]
    %v265 = vld [vmem:[#allocation7 + $0x10] sm:$0xff]
    %v266 = vld [vmem:[#allocation7 + $0x18] sm:$0xff]
    %v267 = vld [vmem:[#allocation7 + $0x20] sm:$0xff]
    %v268 = vld [vmem:[#allocation7 + $0x28] sm:$0xff]
    %v269 = vld [vmem:[#allocation7 + $0x30] sm:$0xff]
    %v270 = vld [vmem:[#allocation7 + $0x38] sm:$0xff]
    %v271 = vld [vmem:[#allocation7 + $0x40] sm:$0xff]
    %v272 = vld [vmem:[#allocation7 + $0x48] sm:$0xff]
    %v273 = vld [vmem:[#allocation7 + $0x50] sm:$0xff]
    %v274 = vld [vmem:[#allocation7 + $0x58] sm:$0xff]
    %v275 = vld [vmem:[#allocation7 + $0x60] sm:$0xff]
    %v276 = vld [vmem:[#allocation7 + $0x68] sm:$0xff]
    %v277 = vld [vmem:[#allocation7 + $0x70] sm:$0xff]
    %v278 = vld [vmem:[#allocation7 + $0x78] sm:$0xff]
    %v279 = vld [vmem:[#allocation7 + $0x80] sm:$0xff]
    %v280 = vld [vmem:[#allocation7 + $0x88] sm:$0xff]
    %v281 = vld [vmem:[#allocation7 + $0x90] sm:$0xff]
    %v282 = vld [vmem:[#allocation7 + $0x98] sm:$0xff]
    %v283 = vld [vmem:[#allocation7 + $0xa0] sm:$0xff]
    %v284 = vld [vmem:[#allocation7 + $0xa8] sm:$0xff]
    %v285 = vld [vmem:[#allocation7 + $0xb0] sm:$0xff]
    %v286 = vld [vmem:[#allocation7 + $0xb8] sm:$0xff]
    %v287 = vld [vmem:[#allocation7 + $0xc0] sm:$0xff]
    %v288 = vld [vmem:[#allocation7 + $0xc8] sm:$0xff]
    %v289 = vld [vmem:[#allocation7 + $0xd0] sm:$0xff]
    %v290 = vld [vmem:[#allocation7 + $0xd8] sm:$0xff]
    %v291 = vld [vmem:[#allocation7 + $0xe0] sm:$0xff]
    %v292 = vld [vmem:[#allocation7 + $0xe8] sm:$0xff]
    %v293 = vld [vmem:[#allocation7 + $0xf0] sm:$0xff]
    %v294 = vld [vmem:[#allocation7 + $0xf8] sm:$0xff]
    %v295 = vld [vmem:[%s3] sm:$0x3]
    %v297 = vlaneseq
    %v298 = vshrl.u32 %v297, 7
    %v299 = vsub.s32 0, %v298
    %v300 = vrot.slane %v295, %v299
    %v301 = vlaneseq
    %v302 = vshrl.u32 %v301, 7
    %v303 = vsub.s32 1, %v302
    %v304 = vrot.slane %v295, %v303
    %307 = vmatprep.subr.mxu0 %v264
    %308 = vmatpush1.msra.mxu0 %v263
    %309 = vmatprep.subr.mxu0 %v266
    %310 = vmatpush1.msra.mxu0 %v265
    %311 = vmatprep.subr.mxu0 %v268
    %312 = vmatpush1.msra.mxu0 %v267
    %313 = vmatprep.subr.mxu0 %v270
    %314 = vmatpush1.msra.mxu0 %v269
    %315 = vmatprep.subr.mxu0 %v272
    %316 = vmatpush1.msra.mxu0 %v271
    %317 = vmatprep.subr.mxu0 %v274
    %318 = vmatpush1.msra.mxu0 %v273
    %319 = vmatprep.subr.mxu0 %v276
    %320 = vmatpush1.msra.mxu0 %v275
    %321 = vmatprep.subr.mxu0 %v278
    %322 = vmatpush1.msra.mxu0 %v277
    %323 = vmatprep.subr.mxu0 %v280
    %324 = vmatpush1.msra.mxu0 %v279
    %325 = vmatprep.subr.mxu0 %v282
    %326 = vmatpush1.msra.mxu0 %v281
    %327 = vmatprep.subr.mxu0 %v284
    %328 = vmatpush1.msra.mxu0 %v283
    %329 = vmatprep.subr.mxu0 %v286
    %330 = vmatpush1.msra.mxu0 %v285
    %331 = vmatprep.subr.mxu0 %v288
    %332 = vmatpush1.msra.mxu0 %v287
    %333 = vmatprep.subr.mxu0 %v290
    %334 = vmatpush1.msra.mxu0 %v289
    %335 = vmatprep.subr.mxu0 %v292
    %336 = vmatpush1.msra.mxu0 %v291
    %337 = vmatprep.subr.mxu0 %v294
    %338 = vmatpush1.msra.mxu0 %v293
    %339 = vmatprep.subr.mxu0 0.0
    %340 = vmatpush1.msra.mxu0 0.0
    %341 = vmatprep.subr.mxu0 0.0
    %342 = vmatpush1.msra.mxu0 0.0
    %343 = vmatprep.subr.mxu0 0.0
    %344 = vmatpush1.msra.mxu0 0.0
    %345 = vmatprep.subr.mxu0 0.0
    %346 = vmatpush1.msra.mxu0 0.0
    %347 = vmatprep.subr.mxu0 0.0
    %348 = vmatpush1.msra.mxu0 0.0
    %349 = vmatprep.subr.mxu0 0.0
    %350 = vmatpush1.msra.mxu0 0.0
    %351 = vmatprep.subr.mxu0 0.0
    %352 = vmatpush1.msra.mxu0 0.0
    %353 = vmatprep.subr.mxu0 0.0
    %354 = vmatpush1.msra.mxu0 0.0
    %355 = vmatprep.subr.mxu0 0.0
    %356 = vmatpush1.msra.mxu0 0.0
    %357 = vmatprep.subr.mxu0 0.0
    %358 = vmatpush1.msra.mxu0 0.0
    %359 = vmatprep.subr.mxu0 0.0
    %360 = vmatpush1.msra.mxu0 0.0
    %361 = vmatprep.subr.mxu0 0.0
    %362 = vmatpush1.msra.mxu0 0.0
    %363 = vmatprep.subr.mxu0 0.0
    %364 = vmatpush1.msra.mxu0 0.0
    %365 = vmatprep.subr.mxu0 0.0
    %366 = vmatpush1.msra.mxu0 0.0
    %367 = vmatprep.subr.mxu0 0.0
    %368 = vmatpush1.msra.mxu0 0.0
    %369 = vmatprep.subr.mxu0 0.0
    %370 = vmatpush1.msra.mxu0 0.0
    %371 = vmatprep.mubr.f32.mxu0 0.0
    %372 = vmatmul.mubr.f32.gmra.mrb[0].mxu0 %v262
    %v373 = vpop.f32.mrb[0].mxu0
    %v374 = vadd.f32 %v300, %v373
    %v375 = vpop.f32.mrb[0].mxu0
    %v376 = vadd.f32 %v304, %v375
    %377 = vdwg.mxu0
    %v378 = vmul.f32 %v374, 0.851
    %v379 = vmul.f32 %v376, 0.851
    %v380 = vtanh.pop %v378
    %v381 = vtanh.pop %v379
    %v382 = vadd.f32 %v380, 1.0
    %v383 = vadd.f32 %v381, 1.0
    %v384 = vmul.f32 %v382, 0.5
    %v385 = vmul.f32 %v383, 0.5
    %v386 = vmul.f32 %v374, %v384
    %v387 = vmul.f32 %v376, %v385
    %v388 = vld [vmem:[#allocation8] sm:$0xff]
    %v389 = vld [vmem:[#allocation8 + $0x8] sm:$0xff]
    %v390 = vld [vmem:[#allocation8 + $0x10] sm:$0xff]
    %v391 = vld [vmem:[#allocation8 + $0x18] sm:$0xff]
    %v392 = vld [vmem:[#allocation8 + $0x20] sm:$0xff]
    %v393 = vld [vmem:[#allocation8 + $0x28] sm:$0xff]
    %v394 = vld [vmem:[#allocation8 + $0x30] sm:$0xff]
    %v395 = vld [vmem:[#allocation8 + $0x38] sm:$0xff]
    %v396 = vld [vmem:[#allocation8 + $0x40] sm:$0xff]
    %v397 = vld [vmem:[#allocation8 + $0x48] sm:$0xff]
    %v398 = vld [vmem:[#allocation8 + $0x50] sm:$0xff]
    %v399 = vld [vmem:[#allocation8 + $0x58] sm:$0xff]
    %v400 = vld [vmem:[#allocation8 + $0x60] sm:$0xff]
    %v401 = vld [vmem:[#allocation8 + $0x68] sm:$0xff]
    %v402 = vld [vmem:[#allocation8 + $0x70] sm:$0xff]
    %v403 = vld [vmem:[#allocation8 + $0x78] sm:$0xff]
    %v404 = vld [vmem:[#allocation8 + $0x80] sm:$0xff]
    %v405 = vld [vmem:[#allocation8 + $0x88] sm:$0xff]
    %v406 = vld [vmem:[#allocation8 + $0x90] sm:$0xff]
    %v407 = vld [vmem:[#allocation8 + $0x98] sm:$0xff]
    %v408 = vld [vmem:[#allocation8 + $0xa0] sm:$0xff]
    %v409 = vld [vmem:[#allocation8 + $0xa8] sm:$0xff]
    %v410 = vld [vmem:[#allocation8 + $0xb0] sm:$0xff]
    %v411 = vld [vmem:[#allocation8 + $0xb8] sm:$0xff]
    %v412 = vld [vmem:[#allocation8 + $0xc0] sm:$0xff]
    %v413 = vld [vmem:[#allocation8 + $0xc8] sm:$0xff]
    %v414 = vld [vmem:[#allocation8 + $0xd0] sm:$0xff]
    %v415 = vld [vmem:[#allocation8 + $0xd8] sm:$0xff]
    %v416 = vld [vmem:[#allocation8 + $0xe0] sm:$0xff]
    %v417 = vld [vmem:[#allocation8 + $0xe8] sm:$0xff]
    %v418 = vld [vmem:[#allocation8 + $0xf0] sm:$0xff]
    %v419 = vld [vmem:[#allocation8 + $0xf8] sm:$0xff]
    %v420 = vld [vmem:[%s5] sm:$0x1]
    %v422 = vlaneseq
    %v423 = vshrl.u32 %v422, 7
    %v424 = vsub.s32 0, %v423
    %v425 = vrot.slane %v420, %v424
    %427 = vmatprep.subr.mxu0 0.0
    %428 = vmatpush1.msra.mxu0 %v388
    %429 = vmatprep.subr.mxu0 0.0
    %430 = vmatpush1.msra.mxu0 %v389
    %431 = vmatprep.subr.mxu0 0.0
    %432 = vmatpush1.msra.mxu0 %v390
    %433 = vmatprep.subr.mxu0 0.0
    %434 = vmatpush1.msra.mxu0 %v391
    %435 = vmatprep.subr.mxu0 0.0
    %436 = vmatpush1.msra.mxu0 %v392
    %437 = vmatprep.subr.mxu0 0.0
    %438 = vmatpush1.msra.mxu0 %v393
    %439 = vmatprep.subr.mxu0 0.0
    %440 = vmatpush1.msra.mxu0 %v394
    %441 = vmatprep.subr.mxu0 0.0
    %442 = vmatpush1.msra.mxu0 %v395
    %443 = vmatprep.subr.mxu0 0.0
    %444 = vmatpush1.msra.mxu0 %v396
    %445 = vmatprep.subr.mxu0 0.0
    %446 = vmatpush1.msra.mxu0 %v397
    %447 = vmatprep.subr.mxu0 0.0
    %448 = vmatpush1.msra.mxu0 %v398
    %449 = vmatprep.subr.mxu0 0.0
    %450 = vmatpush1.msra.mxu0 %v399
    %451 = vmatprep.subr.mxu0 0.0
    %452 = vmatpush1.msra.mxu0 %v400
    %453 = vmatprep.subr.mxu0 0.0
    %454 = vmatpush1.msra.mxu0 %v401
    %455 = vmatprep.subr.mxu0 0.0
    %456 = vmatpush1.msra.mxu0 %v402
    %457 = vmatprep.subr.mxu0 0.0
    %458 = vmatpush1.msra.mxu0 %v403
    %459 = vmatprep.subr.mxu0 0.0
    %460 = vmatpush1.msra.mxu0 %v404
    %461 = vmatprep.subr.mxu0 0.0
    %462 = vmatpush1.msra.mxu0 %v405
    %463 = vmatprep.subr.mxu0 0.0
    %464 = vmatpush1.msra.mxu0 %v406
    %465 = vmatprep.subr.mxu0 0.0
    %466 = vmatpush1.msra.mxu0 %v407
    %467 = vmatprep.subr.mxu0 0.0
    %468 = vmatpush1.msra.mxu0 %v408
    %469 = vmatprep.subr.mxu0 0.0
    %470 = vmatpush1.msra.mxu0 %v409
    %471 = vmatprep.subr.mxu0 0.0
    %472 = vmatpush1.msra.mxu0 %v410
    %473 = vmatprep.subr.mxu0 0.0
    %474 = vmatpush1.msra.mxu0 %v411
    %475 = vmatprep.subr.mxu0 0.0
    %476 = vmatpush1.msra.mxu0 %v412
    %477 = vmatprep.subr.mxu0 0.0
    %478 = vmatpush1.msra.mxu0 %v413
    %479 = vmatprep.subr.mxu0 0.0
    %480 = vmatpush1.msra.mxu0 %v414
    %481 = vmatprep.subr.mxu0 0.0
    %482 = vmatpush1.msra.mxu0 %v415
    %483 = vmatprep.subr.mxu0 0.0
    %484 = vmatpush1.msra.mxu0 %v416
    %485 = vmatprep.subr.mxu0 0.0
    %486 = vmatpush1.msra.mxu0 %v417
    %487 = vmatprep.subr.mxu0 0.0
    %488 = vmatpush1.msra.mxu0 %v418
    %489 = vmatprep.subr.mxu0 0.0
    %490 = vmatpush1.msra.mxu0 %v419
    %491 = vmatprep.mubr.f32.mxu0 %v387
    %492 = vmatmul.mubr.f32.gmra.mrb[0].mxu0 %v386
    %v493 = vpop.f32.mrb[0].mxu0
    %v494 = vadd.f32 %v425, %v493
    %v495 = vpop.f32.mrb[0].mxu0
    %496 = vdwg.mxu0
    %v497 = vadd.f32 %v494, %v83
    %498 = vst [vmem:[#allocation10] sm:$0xff] %v497
    // Predicated region
    $region50: #{tpu_custom_call.1} parent=1 // pred_check
      _
    $region51: #{tpu_custom_call.1} parent=1 // pred_check_branch
      %500 = sbr.rel (0) target = $region53
    $region52: #{tpu_custom_call.1} parent=1 // pred_region
      %s502 = ssub.s32 128, 128
      %503 = vsyncadd [#allocation4], %s502
      %s505 = sshll.u32 [#allocation10], 4
      %s506 = int_to_ptr.vmem [resolvable:$true] %s505
      %508 = dma.vmem_to_hbm [thread:$0]  %s506, 128, %s8, [#allocation4]
    $region53: #{tpu_custom_call.1} parent=1 // pred_fallthru
      _
    // Predicated region
    $region54: #{tpu_custom_call.1} parent=1 // pred_check
      _
    $region55: #{tpu_custom_call.1} parent=1 // pred_check_branch
      %510 = sbr.rel (0) target = $region57
    $region56: #{tpu_custom_call.1} parent=1 // pred_region
      %511 = dma.done [#allocation4], 128
    $region57: #{tpu_custom_call.1} parent=1 // pred_fallthru
      _
    %512 = vsyncpa [#allocation3], 1
    %513 = vsyncpa [#allocation6], 1
    %514 = vsyncpa [#allocation9], 1
    %515 = vsyncpa [#allocation4], 1

</llo_original>
